<compile_context>
chip_gen: v5e
topology: v5e:2x2
jax: 0.10.0
libtpu: 0.0.40
codegen_flags: <defaults>
</compile_context>

<pallas_src>
import math

import jax
import jax.numpy as jnp
from jax.experimental import pallas as pl
from jax.experimental.pallas import tpu as pltpu


def _hbm_copy_kernel(x_hbm_ref, o_hbm_ref, sem):
    # Single whole-buffer HBM -> HBM DMA; no VMEM staging, no grid steps.
    # TODO(synk): if compute is ever fused here, switch back to a BlockSpec
    # pipelined VMEM path with >=1 MiB lane-dense tiles.
    copy = pltpu.make_async_copy(x_hbm_ref, o_hbm_ref, sem)
    copy.start()
    copy.wait()


def _pallas_hbm_copy(x: jax.Array) -> jax.Array:
    """Copy a contiguous array via a single HBM->HBM async DMA."""
    nbytes = int(x.size) * jnp.dtype(x.dtype).itemsize
    return pl.pallas_call(
        _hbm_copy_kernel,
        out_shape=jax.ShapeDtypeStruct(x.shape, x.dtype),
        in_specs=[pl.BlockSpec(memory_space=pl.ANY)],
        out_specs=pl.BlockSpec(memory_space=pl.ANY),
        scratch_shapes=[pltpu.SemaphoreType.DMA],
        cost_estimate=pl.CostEstimate(
            flops=0, transcendentals=0, bytes_accessed=2 * nbytes
        ),
    )(x)


class Reshape:
    """Pallas/JAX equivalent of the PyTorch Reshape module.

    Attributes
    ----------
    shape : list[int]
        Desired output shape, ignoring the leading batch dimension.
    use_kernel : bool
        False (default): metadata-only reshape (optimal; a contiguous reshape
        is a no-op in XLA).  True: additionally route the buffer through the
        Pallas HBM->HBM DMA copy (useful only as a staging / fusion site).
    """

    def __init__(self, shape, use_kernel: bool = False):
        self.shape = list(shape)
        self.use_kernel = use_kernel

    def __call__(self, x: jax.Array) -> jax.Array:
        batch = x.shape[0]
        flat = int(math.prod(x.shape[1:]))

        # Resolve a possible -1 in the target shape (PyTorch .view semantics).
        tgt = list(self.shape)
        if -1 in tgt:
            known = int(math.prod(d for d in tgt if d != -1))
            tgt[tgt.index(-1)] = flat // known
        assert int(math.prod(tgt)) == flat, "Reshape: incompatible target shape"

        # Metadata-only for contiguous (dense, row-major) JAX arrays.
        x_reshaped = x.reshape(batch, *tgt)

        if not self.use_kernel:
            return x_reshaped

        # Pallas path: identity copy of the already-reshaped buffer via one
        # HBM->HBM DMA (no VMEM staging, no grid overhead).
        return _pallas_hbm_copy(x_reshaped)


if __name__ == "__main__":
    key = jax.random.PRNGKey(0)

    # Small NCHW input: batch=2, channels=4, spatial=16x16
    x = jax.random.normal(key, (2, 4, 16, 16), dtype=jnp.float32)

    # --- Pallas kernel path: trailing dims (4, 16, 16) -> (16, 64) ---
    reshape_kernel = Reshape([16, 64], use_kernel=True)
    out = jax.block_until_ready(reshape_kernel(x))

    ref = x.reshape(x.shape[0], 16, 64)
    assert out.shape == (2, 16, 64), out.shape
    assert out.dtype == x.dtype
    assert bool(jnp.array_equal(out, ref)), "Pallas reshape mismatch"

    # --- Default (metadata-only) path, including -1 resolution ---
    reshape_fast = Reshape([-1, 64])  # -> (2, 16, 64)
    out_fast = jax.block_until_ready(reshape_fast(x))
    assert out_fast.shape == (2, 16, 64), out_fast.shape
    assert bool(jnp.array_equal(out_fast, ref)), "Metadata reshape mismatch"

    print("KERNEL_OK")
</pallas_src>

<mosaic_0001>
module attributes {stable_mosaic.version = 11 : i64} {
  func.func @_hbm_copy_kernel(%arg0: memref<2x16x64xf32, #tpu.memory_space<any>>, %arg1: memref<2x16x64xf32, #tpu.memory_space<any>>, %arg2: memref<!tpu.dma_semaphore, #tpu.memory_space<semaphore_mem>>) attributes {dimension_semantics = [], scalar_prefetch = 0 : i64, scratch_operands = 1 : i64, tpu.core_type = #tpu.core_type<tc>} {
    tpu.enqueue_dma source(%arg0 : memref<2x16x64xf32, #tpu.memory_space<any>>) target(%arg1 : memref<2x16x64xf32, #tpu.memory_space<any>>) target_semaphore(%arg2 : memref<!tpu.dma_semaphore, #tpu.memory_space<semaphore_mem>>)
    tpu.wait_dma2 semaphore(%arg2 : memref<!tpu.dma_semaphore, #tpu.memory_space<semaphore_mem>>) src(%arg0 : memref<2x16x64xf32, #tpu.memory_space<any>>) dst(%arg1 : memref<2x16x64xf32, #tpu.memory_space<any>>)
    return
  }
}

</mosaic_0001>

<llo_original>
// kernel: tpu_custom_call.1
$region0: #{tpu_custom_call.1}
  #allocation0 [shape = 'u32[]', space=smem, size = 0x4, offset = 0x4, fixed_abs, tag = 'smem constant byte address 0x4 - core index']
  #allocation1 [shape = 'u32[72,128]{1,0:T(1,128)}', space=vmem, size = 0x9000, scoped, tag = 'internal scratch']
  #allocation2 [shape = 's32[1]{0}', space=sflag, size = 0x4, scoped, tag = 'scratch operand']
  #allocation3 [shape = 's32[]', space=sflag, size = 0x4, offset = 0, fixed_abs, tag = 'sflag constant byte address 0x0 - dummy sync flag']
  #allocation4 [shape = 'u32[0]{0}', space=smem, size = 0, offset = 0, fixed_abs, tag = 'smem constant byte address 0x0 - null']
  %s0 = inlined_call_operand.hbm [shape: f32[2,16,64], index: 0, kind: input, shape index: {}]
  %s1 = inlined_call_operand.hbm [shape: f32[2,16,64], index: 1, kind: output, shape index: {}]
  %s2 = sld [smem:[#allocation0]]
  $region2: #{tpu_custom_call.1} parent=0
    _
  %s4 = ssub.s32 1, %s2
  %s5 = scalar_select 0, %s4, %s2
  %s7 = sshll.u32 1, 14
  %s8 = sxor.u32 4294967295, %s7
  %s10 = sshll.u32 %s0, 4
  %s11 = int_to_ptr.hbm [resolvable:$true] %s10
  %s12 = sshll.u32 %s1, 4
  %s13 = int_to_ptr.hbm [resolvable:$true] %s12
  %16 = dma.general %s11, 512, %s13, [#allocation2], [#allocation3], [#allocation4], 0, 0
  %s17 = smul.u32 2, 16
  %s18 = smul.u32 %s17, 1
  %s19 = sshll.u32 %s18, 4
  %20 = dma.done [#allocation2], %s19
  %21 = vsyncmov [#allocation2]
  %s22 = vpop.sfrf %21
  %p23 = scmp.eq.s32.totalorder %s22, 0
  %p24 = pneg %p23
  %26 = shalt.err (%p24)

</llo_original>
